<compile_context>
chip_gen: v6e
topology: v6e:2x2x1
jax: 0.10.0
libtpu: 0.0.40
codegen_flags: <defaults>
</compile_context>

<pallas_src>
import functools
import math

import jax
import jax.numpy as jnp
import numpy as np
from jax.experimental import pallas as pl
from jax.experimental.pallas import tpu as pltpu

LANES = 128


def _round_up(x, m):
    return ((x + m - 1) // m) * m


def _cdiv(a, b):
    return (a + b - 1) // b


def _fast_pow(x, p):
    """x ** p, small integer p specialized to repeated multiplies (VPU only)."""
    p = float(p)
    ip = int(p)
    if float(ip) == p and 1 <= ip <= 16:
        result = None
        base = x
        e = ip
        while e:
            if e & 1:
                result = base if result is None else result * base
            e >>= 1
            if e:
                base = base * base
        return result
    return jnp.power(x, jnp.float32(p))


def _np_fast_pow(x, p):
    """Host mirror of _fast_pow in float32 semantics (pad-focal correction)."""
    p = float(p)
    ip = int(p)
    x = np.float32(x)
    if float(ip) == p and 1 <= ip <= 16:
        result = None
        base = x
        e = ip
        while e:
            if e & 1:
                result = base if result is None else np.float32(result * base)
            e >>= 1
            if e:
                base = np.float32(base * base)
        return result
    return np.float32(np.power(x, np.float32(p)))


def _bcae_kernel(clf_ref, reg_ref, tag_ref, adc_ref, acc_ref, *,
                 tile_rows, clf_threshold, eps, alpha, gamma,
                 weight_pow, reg_is_l1, binary_tag):
    @pl.when(pl.program_id(1) == 0)
    def _init():
        acc_ref[...] = jnp.zeros_like(acc_ref)

    clf = clf_ref[...].astype(jnp.float32)
    reg = reg_ref[...].astype(jnp.float32)
    tag = tag_ref[...].astype(jnp.float32)
    adc = adc_ref[...].astype(jnp.float32)

    p0 = 1.0 - clf + eps            # "negative" probability (+eps)
    p1 = clf + eps                  # "positive" probability (+eps)

    # ---- focal classification loss elements (gamma is not None) ----
    p0g = p1g = None
    if binary_tag:
        # Binary {0,1} tags: one pow and ONE log2 through the single EUP slot.
        t = tag > 0.5
        focal = (_fast_pow(jnp.where(t, p0, p1), gamma)
                 * jnp.log2(jnp.where(t, p1, p0)))
    else:
        p0g = _fast_pow(p0, gamma)
        p1g = _fast_pow(p1, gamma)
        focal = (p1g * jnp.log2(p0) * (1.0 - tag)
                 + p0g * jnp.log2(p1) * tag)

    # ---- soft mask, single-reciprocal form:
    #   beta = p1/p0   =>   1/(1+(b0/beta)^a) = p1^a / (p1^a + b0^a * p0^a)
    c_const = (float(clf_threshold) / (1.0 - float(clf_threshold))) ** float(alpha)
    if p0g is not None and float(alpha) == float(gamma):
        p0a, p1a = p0g, p1g
    elif p0g is not None and float(alpha) == 2.0 * float(gamma):
        p0a, p1a = p0g * p0g, p1g * p1g          # alpha = 2*gamma (default 4 = 2*2)
    else:
        p0a = _fast_pow(p0, alpha)
        p1a = _fast_pow(p1, alpha)
    denom = p1a + (p0a if c_const == 1.0 else c_const * p0a)
    inv = pl.reciprocal(denom, approx=True)
    inv = inv * (2.0 - denom * inv)              # one Newton step -> ~exact
    soft_mask = p1a * inv

    combined = reg * soft_mask
    diff = combined - adc
    sq = diff * diff

    hard = (clf > clf_threshold).astype(jnp.float32)

    # ---- quantities to accumulate (specialized per config) ----
    updates = [focal, sq]
    if weight_pow is None:
        if reg_is_l1:
            updates.append(jnp.abs(diff))        # plain L1: mean = sum / n on host
        # plain MSE: loss_reg reuses the sq accumulator (sum / n on host)
    else:
        w = _fast_pow(jnp.abs(adc), weight_pow)
        dmetric = jnp.abs(diff) if reg_is_l1 else sq
        updates.append(dmetric * w)
        updates.append(w)
    updates += [hard, tag, hard * tag]

    def fold(x):
        # (tile_rows, 128) -> (8, 128) with pure-VPU adds; the single cross-lane
        # reduction happens once, in XLA, on the tiny resident accumulator.
        return x.reshape(tile_rows // 8, 8, LANES).sum(axis=0)

    for q, val in enumerate(updates):
        acc_ref[q] += fold(val)


def _sublane_multiple(dtype):
    bits = dtype.itemsize * 8
    if bits >= 32:
        return 8
    if bits == 16:
        return 16
    return 32


def _pick_tile_and_vmem(tile_rows):
    if tile_rows is not None:
        return int(tile_rows), 48 * 1024 * 1024
    try:
        vmem = int(getattr(pltpu.get_tpu_info(), "vmem_capacity_bytes", 0) or 0)
    except Exception:
        vmem = 0
    if vmem >= 100 * 1024 * 1024:          # v5e / v6e: 128 MiB physical VMEM
        return 4096, 64 * 1024 * 1024
    return 2048, 48 * 1024 * 1024          # v7x (64 MiB / TC) and unknown parts


def _bcae_partial_sums(clf, reg, tag, adc, *, clf_threshold, eps, alpha, gamma,
                       weight_pow, reg_is_l1, binary_tag, tile_rows=None,
                       num_splits=2):
    """Single fused Pallas pass returning the global partial sums + pad count."""
    assert clf.shape == reg.shape == tag.shape == adc.shape
    n = int(clf.size)

    def flat(x):
        x = jnp.ravel(x)
        if not jnp.issubdtype(x.dtype, jnp.floating):
            # bool/int tags: stream 2 B/elem (0/1 exact in bf16) instead of
            # upcasting to f32; float inputs keep their native dtype.
            x = x.astype(jnp.bfloat16)
        return x

    arrays = [flat(clf), flat(reg), flat(tag), flat(adc)]
    align = max(_sublane_multiple(a.dtype) for a in arrays)

    rows = _cdiv(n, LANES)
    if rows < 4 * align:                   # tiny input: no point splitting
        num_splits = 1

    tile_rows, vmem_limit = _pick_tile_and_vmem(tile_rows)
    tile_cap = max(align, _round_up(
        min(tile_rows, _round_up(_cdiv(rows, num_splits), align)), align))
    steps = _cdiv(rows, tile_cap * num_splits)
    tile = _round_up(_cdiv(rows, steps * num_splits), align)   # minimizes padding
    rows_padded = steps * num_splits * tile
    n_padded = rows_padded * LANES
    pad_count = n_padded - n

    def shape2d(x):
        if pad_count:
            # Zero padding keeps every accumulated quantity exact except the
            # focal sum (constant correction on host) and w_sum for the
            # weight_pow=None configs (w_sum = n on host). No in-kernel mask.
            x = jnp.pad(x, (0, n_padded - n))
        return x.reshape(rows_padded, LANES)

    arrays = [shape2d(x) for x in arrays]

    if weight_pow is None:
        nq = 6 if reg_is_l1 else 5
    else:
        nq = 7

    kernel = functools.partial(
        _bcae_kernel,
        tile_rows=tile, clf_threshold=float(clf_threshold), eps=float(eps),
        alpha=float(alpha), gamma=gamma, weight_pow=weight_pow,
        reg_is_l1=reg_is_l1, binary_tag=binary_tag)

    in_spec = pl.BlockSpec((tile, LANES), lambda c, i: (c * steps + i, 0))

    acc = pl.pallas_call(
        kernel,
        out_shape=jax.ShapeDtypeStruct((num_splits, nq, 8, LANES), jnp.float32),
        grid_spec=pltpu.PrefetchScalarGridSpec(
            num_scalar_prefetch=0,
            grid=(num_splits, steps),
            in_specs=[in_spec, in_spec, in_spec, in_spec],
            out_specs=pl.BlockSpec((None, nq, 8, LANES),
                                   lambda c, i: (c, 0, 0, 0)),
        ),
        compiler_params=pltpu.CompilerParams(
            dimension_semantics=("parallel", "arbitrary"),
            vmem_limit_bytes=vmem_limit,
        ),
    )(*arrays)

    # Tiny final reduce (num_splits x nq x 8 x 128 floats) done once in XLA.
    return jnp.sum(acc, axis=(0, 2, 3)), pad_count


class BCAELossSoft:
    """JAX/Pallas port of the PyTorch BCAELossSoft module (forward only)."""

    def __init__(self, *, clf_threshold=0.5, gamma=2, eps=1e-08, reg_loss='mse',
                 weight_pow=None, alpha=4.0, tile_rows=None, binary_tag=None):
        # TODO(synk): gamma=None (plain nn.BCELoss classification loss) is not
        # implemented; only the FocalLoss path (gamma given) is supported.
        assert gamma is not None, "only the FocalLoss path (gamma is not None) is implemented"
        if weight_pow is not None:
            assert weight_pow > 0, 'weight_pow must be a postive number!'
        self.clf_threshold = float(clf_threshold)
        self.gamma = gamma
        self.eps = float(eps)
        self.reg_loss = reg_loss
        self.weight_pow = weight_pow
        self.alpha = float(alpha)
        self.tile_rows = tile_rows
        self.binary_tag = binary_tag     # None -> infer from tag dtype (bool/int)
        self.clf_coef = 2000.0
        self.expo = 0.5

    def __call__(self, clf_output, reg_output, tag, adc):
        n = int(clf_output.size)
        reg_is_l1 = (self.reg_loss != 'mse')
        binary_tag = self.binary_tag
        if binary_tag is None:
            binary_tag = not jnp.issubdtype(jnp.asarray(tag).dtype, jnp.floating)

        sums_dev, pad_count = _bcae_partial_sums(
            clf_output, reg_output, tag, adc,
            clf_threshold=self.clf_threshold, eps=self.eps, alpha=self.alpha,
            gamma=self.gamma, weight_pow=self.weight_pow, reg_is_l1=reg_is_l1,
            binary_tag=binary_tag, tile_rows=self.tile_rows)

        # Single device->host sync per call (one small vector); everything
        # below, including the stateful clf_coef EMA, is host scalar math.
        sums = np.asarray(jax.device_get(sums_dev), dtype=np.float64)

        focal_sum, sq_sum = sums[0], sums[1]
        i = 2
        abs_sum = wdm_sum = w_sum = None
        if self.weight_pow is None:
            if reg_is_l1:
                abs_sum = sums[i]; i += 1
        else:
            wdm_sum, w_sum = sums[i], sums[i + 1]; i += 2
        pos, true, true_pos = sums[i], sums[i + 1], sums[i + 2]

        # Host-side corrections for the zero padding (replaces in-kernel mask).
        if pad_count:
            p0_pad = np.float32(np.float32(1.0) + np.float32(self.eps))
            pad_focal = float(_np_fast_pow(self.eps, self.gamma)
                              * np.float32(np.log2(p0_pad)))
            focal_sum -= pad_count * pad_focal
            if 0.0 > self.clf_threshold:     # padded clf==0 would count as "pos"
                pos -= pad_count

        loss_clf = -focal_sum / n            # -mean(focal)
        mse = sq_sum / n                     # mean((combined - adc)^2)
        if self.weight_pow is None:
            loss_reg = (abs_sum / n) if reg_is_l1 else (sq_sum / n)
        else:
            loss_reg = wdm_sum / w_sum

        # Stateful clf_coef update (host-side, like the .item() path in torch).
        if math.isnan(loss_clf):
            self.clf_coef = 2000.0
        else:
            self.clf_coef = (self.expo * self.clf_coef
                             + loss_reg / loss_clf) / (self.expo + 1.0)

        return {
            'loss': float(loss_reg + self.clf_coef * loss_clf),
            'clf loss': float(loss_clf),
            'reg loss': float(loss_reg),
            'clf coef': self.clf_coef,
            'pos': float(pos),
            'true': float(true),
            'true pos': float(true_pos),
            'mse': float(mse),
        }


# ------------------------- pure-JAX reference -------------------------------
def _reference_losses(clf, reg, tag, adc, *, clf_threshold=0.5, gamma=2,
                      eps=1e-08, reg_loss='mse', weight_pow=None, alpha=4.0,
                      clf_coef=2000.0, expo=0.5):
    clf = clf.astype(jnp.float32)
    reg = reg.astype(jnp.float32)
    tag = tag.astype(jnp.float32)
    adc = adc.astype(jnp.float32)

    mask = clf > clf_threshold
    beta_zero = clf_threshold / (1.0 - clf_threshold)
    beta = (clf + eps) / (1.0 - clf + eps)
    soft = 1.0 / (1.0 + jnp.power(beta_zero / beta, alpha))
    combined = reg * soft
    pos = jnp.sum(mask)
    true = jnp.sum(tag)
    true_pos = jnp.sum(mask * tag)
    mse = jnp.mean((combined - adc) ** 2)

    p0, p1 = 1.0 - clf + eps, clf + eps
    focal = (jnp.power(p1, gamma) * jnp.log2(p0) * (1.0 - tag)
             + jnp.power(p0, gamma) * jnp.log2(p1) * tag)
    loss_clf = -jnp.mean(focal)

    d = (combined - adc) ** 2 if reg_loss == 'mse' else jnp.abs(combined - adc)
    if weight_pow is None:
        loss_reg = jnp.mean(d)
    else:
        w = jnp.power(jnp.abs(adc), weight_pow)
        loss_reg = jnp.sum(d * w) / jnp.sum(w)

    if math.isnan(float(loss_clf)):
        clf_coef = 2000.0
    else:
        clf_coef = (expo * clf_coef + float(loss_reg) / float(loss_clf)) / (expo + 1.0)

    return {
        'loss': float(loss_reg + clf_coef * loss_clf),
        'clf loss': float(loss_clf),
        'reg loss': float(loss_reg),
        'clf coef': clf_coef,
        'pos': float(pos),
        'true': float(true),
        'true pos': float(true_pos),
        'mse': float(mse),
    }


def _check(got, want, label):
    for k in want:
        assert jnp.allclose(float(got[k]), want[k], rtol=1e-4, atol=1e-5), \
            (label, k, float(got[k]), want[k])


if __name__ == "__main__":
    key = jax.random.PRNGKey(0)
    ks = jax.random.split(key, 8)

    # ---- Config A: target-weighted MSE, size % 128 == 0, boolean tags ----
    shape_a = (2, 4, 16, 16)
    clf_a = jax.random.uniform(ks[0], shape_a, jnp.float32, 0.01, 0.99)
    reg_a = jax.random.uniform(ks[1], shape_a, jnp.float32, 0.0, 1.0)
    tag_a = jax.random.uniform(ks[2], shape_a, jnp.float32) > 0.7       # bool
    adc_a = jax.random.uniform(ks[3], shape_a, jnp.float32, 0.0, 1.0)

    mod_a = BCAELossSoft(weight_pow=2.0)
    got_a = mod_a(clf_a, reg_a, tag_a, adc_a)
    want_a = _reference_losses(clf_a, reg_a, tag_a, adc_a, weight_pow=2.0)
    _check(got_a, want_a, "A")

    # ---- Config B: default module (plain MSE), ragged size -> padding path ----
    shape_b = (2, 3, 15, 17)
    clf_b = jax.random.uniform(ks[4], shape_b, jnp.float32, 0.01, 0.99)
    reg_b = jax.random.uniform(ks[5], shape_b, jnp.float32, 0.0, 1.0)
    tag_b = jax.random.uniform(ks[6], shape_b, jnp.float32) > 0.6        # bool
    adc_b = jax.random.uniform(ks[7], shape_b, jnp.float32, 0.0, 1.0)

    mod_b = BCAELossSoft()
    got_b = mod_b(clf_b, reg_b, tag_b, adc_b)
    want_b = _reference_losses(clf_b, reg_b, tag_b, adc_b)
    _check(got_b, want_b, "B")

    # ---- Config C: plain L1 regression loss (weight_pow None, reg_loss != mse) ----
    mod_c = BCAELossSoft(reg_loss='mae')
    got_c = mod_c(clf_b, reg_b, tag_b, adc_b)
    want_c = _reference_losses(clf_b, reg_b, tag_b, adc_b, reg_loss='mae')
    _check(got_c, want_c, "C")

    jax.block_until_ready(jnp.zeros(()))
    print("KERNEL_OK")
</pallas_src>

<mosaic_0001>
module attributes {stable_mosaic.version = 11 : i64} {
  func.func @_bcae_kernel(%arg0: i32, %arg1: i32, %arg2: memref<16x128xf32, #tpu.memory_space<vmem>>, %arg3: memref<16x128xf32, #tpu.memory_space<vmem>>, %arg4: memref<16x128xbf16, #tpu.memory_space<vmem>>, %arg5: memref<16x128xf32, #tpu.memory_space<vmem>>, %arg6: memref<1x7x8x128xf32, #tpu.memory_space<vmem>>) attributes {dimension_semantics = [#tpu.dimension_semantics<parallel>, #tpu.dimension_semantics<arbitrary>], iteration_bounds = array<i64: 1, 1>, scalar_prefetch = 0 : i64, scratch_operands = 0 : i64, tpu.core_type = #tpu.core_type<tc>, window_params = [{transform_indices = @transform_0, window_bounds = array<i64: 16, 128>}, {transform_indices = @transform_1, window_bounds = array<i64: 16, 128>}, {transform_indices = @transform_2, window_bounds = array<i64: 16, 128>}, {transform_indices = @transform_3, window_bounds = array<i64: 16, 128>}, {transform_indices = @transform_4, window_bounds = array<i64: 1, 7, 8, 128>}]} {
    %c0_i32 = arith.constant 0 : i32
    %0 = arith.cmpi eq, %arg1, %c0_i32 : i32
    %1 = arith.extui %0 : i1 to i32
    %c0_i32_0 = arith.constant 0 : i32
    %2 = arith.cmpi ne, %1, %c0_i32_0 : i32
    scf.if %2 {
      %cst_71 = arith.constant 0.000000e+00 : f32
      %102 = vector.broadcast %cst_71 : f32 to vector<7x8x128xf32>
      %c0_72 = arith.constant 0 : index
      %c0_73 = arith.constant 0 : index
      %c0_74 = arith.constant 0 : index
      %c0_75 = arith.constant 0 : index
      %103 = vector.load %arg6[%c0_72, %c0_73, %c0_74, %c0_75] : memref<1x7x8x128xf32, #tpu.memory_space<vmem>>, vector<1x7x8x128xf32>
      %104 = vector.shape_cast %103 : vector<1x7x8x128xf32> to vector<7x8x128xf32>
      %105 = vector.shape_cast %102 : vector<7x8x128xf32> to vector<1x7x8x128xf32>
      tpu.vector_store %arg6[%c0_72, %c0_73, %c0_74, %c0_75], %105 {strides = array<i32>} : memref<1x7x8x128xf32, #tpu.memory_space<vmem>>, vector<1x7x8x128xf32>,
    } else {
    }
    %c0 = arith.constant 0 : index
    %c0_1 = arith.constant 0 : index
    %3 = vector.load %arg2[%c0, %c0_1] : memref<16x128xf32, #tpu.memory_space<vmem>>, vector<16x128xf32>
    %c0_2 = arith.constant 0 : index
    %c0_3 = arith.constant 0 : index
    %4 = vector.load %arg3[%c0_2, %c0_3] : memref<16x128xf32, #tpu.memory_space<vmem>>, vector<16x128xf32>
    %c0_4 = arith.constant 0 : index
    %c0_5 = arith.constant 0 : index
    %5 = vector.load %arg4[%c0_4, %c0_5] : memref<16x128xbf16, #tpu.memory_space<vmem>>, vector<16x128xbf16>
    %6 = arith.extf %5 : vector<16x128xbf16> to vector<16x128xf32>
    %c0_6 = arith.constant 0 : index
    %c0_7 = arith.constant 0 : index
    %7 = vector.load %arg5[%c0_6, %c0_7] : memref<16x128xf32, #tpu.memory_space<vmem>>, vector<16x128xf32>
    %cst = arith.constant 1.000000e+00 : f32
    %8 = vector.broadcast %cst : f32 to vector<16x128xf32>
    %9 = arith.subf %8, %3 : vector<16x128xf32>
    %cst_8 = arith.constant 9.99999993E-9 : f32
    %10 = vector.broadcast %cst_8 : f32 to vector<16x128xf32>
    %11 = arith.addf %9, %10 : vector<16x128xf32>
    %cst_9 = arith.constant 9.99999993E-9 : f32
    %12 = vector.broadcast %cst_9 : f32 to vector<16x128xf32>
    %13 = arith.addf %3, %12 : vector<16x128xf32>
    %cst_10 = arith.constant 5.000000e-01 : f32
    %14 = vector.broadcast %cst_10 : f32 to vector<16x128xf32>
    %15 = arith.cmpf ogt, %6, %14 : vector<16x128xf32>
    %16 = arith.select %15, %11, %13 : vector<16x128xi1>, vector<16x128xf32>
    %17 = arith.mulf %16, %16 : vector<16x128xf32>
    %18 = arith.select %15, %13, %11 : vector<16x128xi1>, vector<16x128xf32>
    %19 = math.log %18 : vector<16x128xf32>
    %cst_11 = arith.constant 2.000000e+00 : f32
    %20 = math.log %cst_11 : f32
    %21 = vector.broadcast %20 : f32 to vector<16x128xf32>
    %22 = arith.divf %19, %21 : vector<16x128xf32>
    %23 = arith.mulf %17, %22 : vector<16x128xf32>
    %24 = arith.mulf %11, %11 : vector<16x128xf32>
    %25 = arith.mulf %24, %24 : vector<16x128xf32>
    %26 = arith.mulf %13, %13 : vector<16x128xf32>
    %27 = arith.mulf %26, %26 : vector<16x128xf32>
    %28 = arith.addf %27, %25 : vector<16x128xf32>
    %29 = tpu.reciprocal %28 {approx = true} : vector<16x128xf32> -> vector<16x128xf32>
    %30 = arith.mulf %28, %29 : vector<16x128xf32>
    %cst_12 = arith.constant 2.000000e+00 : f32
    %31 = vector.broadcast %cst_12 : f32 to vector<16x128xf32>
    %32 = arith.subf %31, %30 : vector<16x128xf32>
    %33 = arith.mulf %29, %32 : vector<16x128xf32>
    %34 = arith.mulf %27, %33 : vector<16x128xf32>
    %35 = arith.mulf %4, %34 : vector<16x128xf32>
    %36 = arith.subf %35, %7 : vector<16x128xf32>
    %37 = arith.mulf %36, %36 : vector<16x128xf32>
    %cst_13 = arith.constant 5.000000e-01 : f32
    %38 = vector.broadcast %cst_13 : f32 to vector<16x128xf32>
    %39 = arith.cmpf ogt, %3, %38 : vector<16x128xf32>
    %40 = arith.extui %39 : vector<16x128xi1> to vector<16x128xi32>
    %41 = arith.sitofp %40 : vector<16x128xi32> to vector<16x128xf32>
    %42 = math.absf %7 : vector<16x128xf32>
    %43 = arith.mulf %42, %42 : vector<16x128xf32>
    %44 = arith.mulf %37, %43 : vector<16x128xf32>
    %45 = arith.mulf %41, %6 : vector<16x128xf32>
    %c0_14 = arith.constant 0 : index
    %c0_15 = arith.constant 0 : index
    %c0_16 = arith.constant 0 : index
    %c0_17 = arith.constant 0 : index
    %46 = vector.load %arg6[%c0_14, %c0_15, %c0_16, %c0_17] : memref<1x7x8x128xf32, #tpu.memory_space<vmem>>, vector<1x1x8x128xf32>
    %47 = vector.shape_cast %46 : vector<1x1x8x128xf32> to vector<8x128xf32>
    %48 = vector.shape_cast %23 : vector<16x128xf32> to vector<2x8x128xf32>
    %cst_18 = arith.constant dense<0.000000e+00> : vector<8x128xf32>
    %49 = vector.multi_reduction <add>, %48, %cst_18 [0] : vector<2x8x128xf32> to vector<8x128xf32>
    %50 = arith.addf %47, %49 : vector<8x128xf32>
    %c0_19 = arith.constant 0 : index
    %c0_20 = arith.constant 0 : index
    %c0_21 = arith.constant 0 : index
    %c0_22 = arith.constant 0 : index
    %51 = vector.load %arg6[%c0_19, %c0_20, %c0_21, %c0_22] : memref<1x7x8x128xf32, #tpu.memory_space<vmem>>, vector<1x1x8x128xf32>
    %52 = vector.shape_cast %51 : vector<1x1x8x128xf32> to vector<8x128xf32>
    %53 = vector.shape_cast %50 : vector<8x128xf32> to vector<1x1x8x128xf32>
    tpu.vector_store %arg6[%c0_19, %c0_20, %c0_21, %c0_22], %53 {strides = array<i32>} : memref<1x7x8x128xf32, #tpu.memory_space<vmem>>, vector<1x1x8x128xf32>,
    %c0_23 = arith.constant 0 : index
    %c1 = arith.constant 1 : index
    %c0_24 = arith.constant 0 : index
    %c0_25 = arith.constant 0 : index
    %54 = vector.load %arg6[%c0_23, %c1, %c0_24, %c0_25] : memref<1x7x8x128xf32, #tpu.memory_space<vmem>>, vector<1x1x8x128xf32>
    %55 = vector.shape_cast %54 : vector<1x1x8x128xf32> to vector<8x128xf32>
    %56 = vector.shape_cast %37 : vector<16x128xf32> to vector<2x8x128xf32>
    %cst_26 = arith.constant dense<0.000000e+00> : vector<8x128xf32>
    %57 = vector.multi_reduction <add>, %56, %cst_26 [0] : vector<2x8x128xf32> to vector<8x128xf32>
    %58 = arith.addf %55, %57 : vector<8x128xf32>
    %c0_27 = arith.constant 0 : index
    %c1_28 = arith.constant 1 : index
    %c0_29 = arith.constant 0 : index
    %c0_30 = arith.constant 0 : index
    %59 = vector.load %arg6[%c0_27, %c1_28, %c0_29, %c0_30] : memref<1x7x8x128xf32, #tpu.memory_space<vmem>>, vector<1x1x8x128xf32>
    %60 = vector.shape_cast %59 : vector<1x1x8x128xf32> to vector<8x128xf32>
    %61 = vector.shape_cast %58 : vector<8x128xf32> to vector<1x1x8x128xf32>
    tpu.vector_store %arg6[%c0_27, %c1_28, %c0_29, %c0_30], %61 {strides = array<i32>} : memref<1x7x8x128xf32, #tpu.memory_space<vmem>>, vector<1x1x8x128xf32>,
    %c0_31 = arith.constant 0 : index
    %c2 = arith.constant 2 : index
    %c0_32 = arith.constant 0 : index
    %c0_33 = arith.constant 0 : index
    %62 = vector.load %arg6[%c0_31, %c2, %c0_32, %c0_33] : memref<1x7x8x128xf32, #tpu.memory_space<vmem>>, vector<1x1x8x128xf32>
    %63 = vector.shape_cast %62 : vector<1x1x8x128xf32> to vector<8x128xf32>
    %64 = vector.shape_cast %44 : vector<16x128xf32> to vector<2x8x128xf32>
    %cst_34 = arith.constant dense<0.000000e+00> : vector<8x128xf32>
    %65 = vector.multi_reduction <add>, %64, %cst_34 [0] : vector<2x8x128xf32> to vector<8x128xf32>
    %66 = arith.addf %63, %65 : vector<8x128xf32>
    %c0_35 = arith.constant 0 : index
    %c2_36 = arith.constant 2 : index
    %c0_37 = arith.constant 0 : index
    %c0_38 = arith.constant 0 : index
    %67 = vector.load %arg6[%c0_35, %c2_36, %c0_37, %c0_38] : memref<1x7x8x128xf32, #tpu.memory_space<vmem>>, vector<1x1x8x128xf32>
    %68 = vector.shape_cast %67 : vector<1x1x8x128xf32> to vector<8x128xf32>
    %69 = vector.shape_cast %66 : vector<8x128xf32> to vector<1x1x8x128xf32>
    tpu.vector_store %arg6[%c0_35, %c2_36, %c0_37, %c0_38], %69 {strides = array<i32>} : memref<1x7x8x128xf32, #tpu.memory_space<vmem>>, vector<1x1x8x128xf32>,
    %c0_39 = arith.constant 0 : index
    %c3 = arith.constant 3 : index
    %c0_40 = arith.constant 0 : index
    %c0_41 = arith.constant 0 : index
    %70 = vector.load %arg6[%c0_39, %c3, %c0_40, %c0_41] : memref<1x7x8x128xf32, #tpu.memory_space<vmem>>, vector<1x1x8x128xf32>
    %71 = vector.shape_cast %70 : vector<1x1x8x128xf32> to vector<8x128xf32>
    %72 = vector.shape_cast %43 : vector<16x128xf32> to vector<2x8x128xf32>
    %cst_42 = arith.constant dense<0.000000e+00> : vector<8x128xf32>
    %73 = vector.multi_reduction <add>, %72, %cst_42 [0] : vector<2x8x128xf32> to vector<8x128xf32>
    %74 = arith.addf %71, %73 : vector<8x128xf32>
    %c0_43 = arith.constant 0 : index
    %c3_44 = arith.constant 3 : index
    %c0_45 = arith.constant 0 : index
    %c0_46 = arith.constant 0 : index
    %75 = vector.load %arg6[%c0_43, %c3_44, %c0_45, %c0_46] : memref<1x7x8x128xf32, #tpu.memory_space<vmem>>, vector<1x1x8x128xf32>
    %76 = vector.shape_cast %75 : vector<1x1x8x128xf32> to vector<8x128xf32>
    %77 = vector.shape_cast %74 : vector<8x128xf32> to vector<1x1x8x128xf32>
    tpu.vector_store %arg6[%c0_43, %c3_44, %c0_45, %c0_46], %77 {strides = array<i32>} : memref<1x7x8x128xf32, #tpu.memory_space<vmem>>, vector<1x1x8x128xf32>,
    %c0_47 = arith.constant 0 : index
    %c4 = arith.constant 4 : index
    %c0_48 = arith.constant 0 : index
    %c0_49 = arith.constant 0 : index
    %78 = vector.load %arg6[%c0_47, %c4, %c0_48, %c0_49] : memref<1x7x8x128xf32, #tpu.memory_space<vmem>>, vector<1x1x8x128xf32>
    %79 = vector.shape_cast %78 : vector<1x1x8x128xf32> to vector<8x128xf32>
    %80 = vector.shape_cast %41 : vector<16x128xf32> to vector<2x8x128xf32>
    %cst_50 = arith.constant dense<0.000000e+00> : vector<8x128xf32>
    %81 = vector.multi_reduction <add>, %80, %cst_50 [0] : vector<2x8x128xf32> to vector<8x128xf32>
    %82 = arith.addf %79, %81 : vector<8x128xf32>
    %c0_51 = arith.constant 0 : index
    %c4_52 = arith.constant 4 : index
    %c0_53 = arith.constant 0 : index
    %c0_54 = arith.constant 0 : index
    %83 = vector.load %arg6[%c0_51, %c4_52, %c0_53, %c0_54] : memref<1x7x8x128xf32, #tpu.memory_space<vmem>>, vector<1x1x8x128xf32>
    %84 = vector.shape_cast %83 : vector<1x1x8x128xf32> to vector<8x128xf32>
    %85 = vector.shape_cast %82 : vector<8x128xf32> to vector<1x1x8x128xf32>
    tpu.vector_store %arg6[%c0_51, %c4_52, %c0_53, %c0_54], %85 {strides = array<i32>} : memref<1x7x8x128xf32, #tpu.memory_space<vmem>>, vector<1x1x8x128xf32>,
    %c0_55 = arith.constant 0 : index
    %c5 = arith.constant 5 : index
    %c0_56 = arith.constant 0 : index
    %c0_57 = arith.constant 0 : index
    %86 = vector.load %arg6[%c0_55, %c5, %c0_56, %c0_57] : memref<1x7x8x128xf32, #tpu.memory_space<vmem>>, vector<1x1x8x128xf32>
    %87 = vector.shape_cast %86 : vector<1x1x8x128xf32> to vector<8x128xf32>
    %88 = vector.shape_cast %6 : vector<16x128xf32> to vector<2x8x128xf32>
    %cst_58 = arith.constant dense<0.000000e+00> : vector<8x128xf32>
    %89 = vector.multi_reduction <add>, %88, %cst_58 [0] : vector<2x8x128xf32> to vector<8x128xf32>
    %90 = arith.addf %87, %89 : vector<8x128xf32>
    %c0_59 = arith.constant 0 : index
    %c5_60 = arith.constant 5 : index
    %c0_61 = arith.constant 0 : index
    %c0_62 = arith.constant 0 : index
    %91 = vector.load %arg6[%c0_59, %c5_60, %c0_61, %c0_62] : memref<1x7x8x128xf32, #tpu.memory_space<vmem>>, vector<1x1x8x128xf32>
    %92 = vector.shape_cast %91 : vector<1x1x8x128xf32> to vector<8x128xf32>
    %93 = vector.shape_cast %90 : vector<8x128xf32> to vector<1x1x8x128xf32>
    tpu.vector_store %arg6[%c0_59, %c5_60, %c0_61, %c0_62], %93 {strides = array<i32>} : memref<1x7x8x128xf32, #tpu.memory_space<vmem>>, vector<1x1x8x128xf32>,
    %c0_63 = arith.constant 0 : index
    %c6 = arith.constant 6 : index
    %c0_64 = arith.constant 0 : index
    %c0_65 = arith.constant 0 : index
    %94 = vector.load %arg6[%c0_63, %c6, %c0_64, %c0_65] : memref<1x7x8x128xf32, #tpu.memory_space<vmem>>, vector<1x1x8x128xf32>
    %95 = vector.shape_cast %94 : vector<1x1x8x128xf32> to vector<8x128xf32>
    %96 = vector.shape_cast %45 : vector<16x128xf32> to vector<2x8x128xf32>
    %cst_66 = arith.constant dense<0.000000e+00> : vector<8x128xf32>
    %97 = vector.multi_reduction <add>, %96, %cst_66 [0] : vector<2x8x128xf32> to vector<8x128xf32>
    %98 = arith.addf %95, %97 : vector<8x128xf32>
    %c0_67 = arith.constant 0 : index
    %c6_68 = arith.constant 6 : index
    %c0_69 = arith.constant 0 : index
    %c0_70 = arith.constant 0 : index
    %99 = vector.load %arg6[%c0_67, %c6_68, %c0_69, %c0_70] : memref<1x7x8x128xf32, #tpu.memory_space<vmem>>, vector<1x1x8x128xf32>
    %100 = vector.shape_cast %99 : vector<1x1x8x128xf32> to vector<8x128xf32>
    %101 = vector.shape_cast %98 : vector<8x128xf32> to vector<1x1x8x128xf32>
    tpu.vector_store %arg6[%c0_67, %c6_68, %c0_69, %c0_70], %101 {strides = array<i32>} : memref<1x7x8x128xf32, #tpu.memory_space<vmem>>, vector<1x1x8x128xf32>,
    return
  }
  func.func @transform_0(%arg0: i32, %arg1: i32) -> (i32, i32) {
    %c1_i32 = arith.constant 1 : i32
    %0 = arith.muli %arg0, %c1_i32 : i32
    %1 = arith.addi %0, %arg1 : i32
    %c0_i32 = arith.constant 0 : i32
    %c0_i32_0 = arith.constant 0 : i32
    return %1, %c0_i32 : i32, i32
  }
  func.func @transform_1(%arg0: i32, %arg1: i32) -> (i32, i32) {
    %c1_i32 = arith.constant 1 : i32
    %0 = arith.muli %arg0, %c1_i32 : i32
    %1 = arith.addi %0, %arg1 : i32
    %c0_i32 = arith.constant 0 : i32
    %c0_i32_0 = arith.constant 0 : i32
    return %1, %c0_i32 : i32, i32
  }
  func.func @transform_2(%arg0: i32, %arg1: i32) -> (i32, i32) {
    %c1_i32 = arith.constant 1 : i32
    %0 = arith.muli %arg0, %c1_i32 : i32
    %1 = arith.addi %0, %arg1 : i32
    %c0_i32 = arith.constant 0 : i32
    %c0_i32_0 = arith.constant 0 : i32
    return %1, %c0_i32 : i32, i32
  }
  func.func @transform_3(%arg0: i32, %arg1: i32) -> (i32, i32) {
    %c1_i32 = arith.constant 1 : i32
    %0 = arith.muli %arg0, %c1_i32 : i32
    %1 = arith.addi %0, %arg1 : i32
    %c0_i32 = arith.constant 0 : i32
    %c0_i32_0 = arith.constant 0 : i32
    return %1, %c0_i32 : i32, i32
  }
  func.func @transform_4(%arg0: i32, %arg1: i32) -> (i32, i32, i32, i32) {
    %c0_i32 = arith.constant 0 : i32
    %c0_i32_0 = arith.constant 0 : i32
    %c0_i32_1 = arith.constant 0 : i32
    %c0_i32_2 = arith.constant 0 : i32
    return %arg0, %c0_i32, %c0_i32_0, %c0_i32_1 : i32, i32, i32, i32
  }
}

</mosaic_0001>

<llo_original>
// kernel: tpu_custom_call.1
$region0: #{tpu_custom_call.1}
  #allocation0 [shape = 'u32[]', space=smem, size = 0x4, offset = 0x4, fixed_abs, tag = 'smem constant byte address 0x4 - core index']
  #allocation1 [shape = 'u32[144,128]{1,0:T(1,128)}', space=vmem, size = 0x12000, scoped, tag = 'internal scratch']
  %s0 = inlined_call_operand.hbm [shape: f32[16,128], index: 0, kind: input, shape index: {}]
  %s1 = inlined_call_operand.hbm [shape: f32[16,128], index: 1, kind: input, shape index: {}]
  %s2 = inlined_call_operand.hbm [shape: bf16[16,128], index: 2, kind: input, shape index: {}]
  %s3 = inlined_call_operand.hbm [shape: f32[16,128], index: 3, kind: input, shape index: {}]
  %s4 = inlined_call_operand.hbm [shape: f32[1,7,8,128], index: 4, kind: output, shape index: {}]
  %s5 = sld [smem:[#allocation0]]
  $region46: #{tpu_custom_call.1} parent=0
    _
  %s7 = ssub.s32 1, %s5
  %s8 = scalar_select 0, %s7, %s5
  $region1: #{tpu_custom_call.1} parent=0
    #allocation2 [shape = 'u8[8192]{0}', space=vmem, size = 0x2000, scoped, tag = 'input window, operand 0, single buffered']
    #allocation3 [shape = 's32[1]{0}', space=sflag, size = 0x4, scoped, tag = 'scoped memory for tpu_custom_call.1']
    #allocation4 [shape = 's32[1]{0}', space=sflag, size = 0x4, scoped, tag = 'scoped memory for tpu_custom_call.1']
    #allocation5 [shape = 'u8[8192]{0}', space=vmem, size = 0x2000, scoped, tag = 'input window, operand 1, single buffered']
    #allocation6 [shape = 's32[1]{0}', space=sflag, size = 0x4, scoped, tag = 'scoped memory for tpu_custom_call.1']
    #allocation7 [shape = 'u8[4096]{0}', space=vmem, size = 0x1000, scoped, tag = 'input window, operand 2, single buffered']
    #allocation8 [shape = 'u8[8192]{0}', space=vmem, size = 0x2000, scoped, tag = 'input window, operand 3, single buffered']
    #allocation9 [shape = 's32[1]{0}', space=sflag, size = 0x4, scoped, tag = 'scoped memory for tpu_custom_call.1']
    #allocation10 [shape = 'u8[28672]{0}', space=vmem, size = 0x7000, scoped, tag = 'output window, operand 0, single buffered']
    %9 = vsyncpa [#allocation3], 0
    %10 = vsyncpa [#allocation6], 0
    %11 = vsyncpa [#allocation9], 0
    %12 = vsyncpa [#allocation4], 0
    // Predicated region
    $region2: #{tpu_custom_call.1} parent=1 // pred_check
      _
    $region3: #{tpu_custom_call.1} parent=1 // pred_check_branch
      %14 = sbr.rel (0) target = $region5
    $region4: #{tpu_custom_call.1} parent=1 // pred_region
      %s15 = sadd.s32 0, 0
      %s16 = smul.u32 2, %s15
      %s18 = ssub.s32 256, 256
      %19 = vsyncadd [#allocation3], %s18
      %s20 = smul.addr %s16, 128
      %s21 = scalar_lea.hbm %s0, %s20
      %s22 = sshll.u32 [#allocation2], 4
      %s23 = int_to_ptr.vmem [resolvable:$true] %s22
      %28 = dma.hbm_to_vmem [thread:$0]  %s21, 256, %s23, [#allocation3], 128, 128, 8
    $region5: #{tpu_custom_call.1} parent=1 // pred_fallthru
      _
    // Predicated region
    $region6: #{tpu_custom_call.1} parent=1 // pred_check
      _
    $region7: #{tpu_custom_call.1} parent=1 // pred_check_branch
      %30 = sbr.rel (0) target = $region9
    $region8: #{tpu_custom_call.1} parent=1 // pred_region
      %s31 = sadd.s32 0, 0
      %s32 = smul.u32 2, %s31
      %s34 = ssub.s32 256, 256
      %35 = vsyncadd [#allocation6], %s34
      %s36 = smul.addr %s32, 128
      %s37 = scalar_lea.hbm %s1, %s36
      %s38 = sshll.u32 [#allocation5], 4
      %s39 = int_to_ptr.vmem [resolvable:$true] %s38
      %44 = dma.hbm_to_vmem [thread:$0]  %s37, 256, %s39, [#allocation6], 128, 128, 8
    $region9: #{tpu_custom_call.1} parent=1 // pred_fallthru
      _
    // Predicated region
    $region10: #{tpu_custom_call.1} parent=1 // pred_check
      _
    $region11: #{tpu_custom_call.1} parent=1 // pred_check_branch
      %46 = sbr.rel (0) target = $region13
    $region12: #{tpu_custom_call.1} parent=1 // pred_region
      %s47 = sadd.s32 0, 0
      %s48 = smul.u32 2, %s47
      %s50 = ssub.s32 128, 128
      %51 = vsyncadd [#allocation6], %s50
      %s52 = smul.addr %s48, 64
      %s53 = scalar_lea.hbm %s2, %s52
      %s54 = sshll.u32 [#allocation7], 4
      %s55 = int_to_ptr.vmem [resolvable:$true] %s54
      %60 = dma.hbm_to_vmem [thread:$0]  %s53, 128, %s55, [#allocation6], 64, 64, 4
    $region13: #{tpu_custom_call.1} parent=1 // pred_fallthru
      _
    // Predicated region
    $region14: #{tpu_custom_call.1} parent=1 // pred_check
      _
    $region15: #{tpu_custom_call.1} parent=1 // pred_check_branch
      %62 = sbr.rel (0) target = $region17
    $region16: #{tpu_custom_call.1} parent=1 // pred_region
      %s63 = sadd.s32 0, 0
      %s64 = smul.u32 2, %s63
      %s66 = ssub.s32 256, 256
      %67 = vsyncadd [#allocation9], %s66
      %s68 = smul.addr %s64, 128
      %s69 = scalar_lea.hbm %s3, %s68
      %s70 = sshll.u32 [#allocation8], 4
      %s71 = int_to_ptr.vmem [resolvable:$true] %s70
      %76 = dma.hbm_to_vmem [thread:$0]  %s69, 256, %s71, [#allocation9], 128, 128, 8
    $region17: #{tpu_custom_call.1} parent=1 // pred_fallthru
      _
    // Predicated region
    $region18: #{tpu_custom_call.1} parent=1 // pred_check
      _
    $region19: #{tpu_custom_call.1} parent=1 // pred_check_branch
      %78 = sbr.rel (0) target = $region21
    $region20: #{tpu_custom_call.1} parent=1 // pred_region
      %79 = dma.done [#allocation3], 256
    $region21: #{tpu_custom_call.1} parent=1 // pred_fallthru
      _
    // Predicated region
    $region22: #{tpu_custom_call.1} parent=1 // pred_check
      _
    $region23: #{tpu_custom_call.1} parent=1 // pred_check_branch
      %81 = sbr.rel (0) target = $region25
    $region24: #{tpu_custom_call.1} parent=1 // pred_region
      %82 = dma.done [#allocation6], 256
    $region25: #{tpu_custom_call.1} parent=1 // pred_fallthru
      _
    // Predicated region
    $region26: #{tpu_custom_call.1} parent=1 // pred_check
      _
    $region27: #{tpu_custom_call.1} parent=1 // pred_check_branch
      %84 = sbr.rel (0) target = $region29
    $region28: #{tpu_custom_call.1} parent=1 // pred_region
      %85 = dma.done [#allocation6], 128
    $region29: #{tpu_custom_call.1} parent=1 // pred_fallthru
      _
    // Predicated region
    $region30: #{tpu_custom_call.1} parent=1 // pred_check
      _
    $region31: #{tpu_custom_call.1} parent=1 // pred_check_branch
      %87 = sbr.rel (0) target = $region33
    $region32: #{tpu_custom_call.1} parent=1 // pred_region
      %88 = dma.done [#allocation9], 256
    $region33: #{tpu_custom_call.1} parent=1 // pred_fallthru
      _
    %s89 = sadd.s32 0, 0
    %s90 = smul.u32 2, %s89
    %s91 = sadd.s32 0, 0
    %s92 = smul.u32 2, %s91
    %s93 = sadd.s32 0, 0
    %s94 = smul.u32 2, %s93
    %s95 = sadd.s32 0, 0
    %s96 = smul.u32 2, %s95
    %p97 = scmp.eq.s32.totalorder 0, 0
    // Predicated region
    $region34: #{tpu_custom_call.1} parent=1 // pred_check
      %p98 = pneg %p97
    $region35: #{tpu_custom_call.1} parent=1 // pred_check_branch
      %100 = sbr.rel (%p98) target = $region37
    $region36: #{tpu_custom_call.1} parent=1 // pred_region
      %101 = vst [vmem:[#allocation10] sm:$0xff] 0.0
      %102 = vst [vmem:[#allocation10 + $0x8] sm:$0xff] 0.0
      %103 = vst [vmem:[#allocation10 + $0x10] sm:$0xff] 0.0
      %104 = vst [vmem:[#allocation10 + $0x18] sm:$0xff] 0.0
      %105 = vst [vmem:[#allocation10 + $0x20] sm:$0xff] 0.0
      %106 = vst [vmem:[#allocation10 + $0x28] sm:$0xff] 0.0
      %107 = vst [vmem:[#allocation10 + $0x30] sm:$0xff] 0.0
    $region37: #{tpu_custom_call.1} parent=1 // pred_fallthru
      _
    %v108 = vld [vmem:[#allocation2] sm:$0xff]
    %v109 = vld [vmem:[#allocation2 + $0x8] sm:$0xff]
    %v110 = vld [vmem:[#allocation5] sm:$0xff]
    %v111 = vld [vmem:[#allocation5 + $0x8] sm:$0xff]
    %v112 = vld [vmem:[#allocation7] sm:$0xf]
    %v113 = vld [vmem:[#allocation7 + $0x4] sm:$0xf]
    %v114 = vunpack.c.l.bf16 %v112
    %v115 = vunpack.c.l.bf16 %v113
    %v116 = vld [vmem:[#allocation8] sm:$0xff]
    %v117 = vld [vmem:[#allocation8 + $0x8] sm:$0xff]
    %v118 = vsub.f32 1.0, %v108
    %v119 = vsub.f32 1.0, %v109
    %v120 = vadd.f32 %v118, 1e-08
    %v121 = vadd.f32 %v119, 1e-08
    %v122 = vadd.f32 %v108, 1e-08
    %v123 = vadd.f32 %v109, 1e-08
    %vm124 = vcmp.gt.f32.partialorder %v114, 0.5
    %vm125 = vcmp.gt.f32.partialorder %v115, 0.5
    %v126 = vsel %vm124, %v120, %v122
    %v127 = vsel %vm125, %v121, %v123
    %v128 = vmul.f32 %v126, %v126
    %v129 = vmul.f32 %v127, %v127
    %v130 = vsel %vm124, %v122, %v120
    %v131 = vsel %vm125, %v123, %v121
    %v132 = vlog2.pop %v130
    %v133 = vmul.f32 %v132, 0.6931472
    %v134 = vlog2.pop %v131
    %v135 = vmul.f32 %v134, 0.6931472
    %v136 = vrcp.pop 0.6931472
    %v137 = vmul.f32 %v133, %v136
    %v138 = vmul.f32 %v135, %v136
    %v139 = vmul.f32 %v128, %v137
    %v140 = vmul.f32 %v129, %v138
    %v141 = vmul.f32 %v120, %v120
    %v142 = vmul.f32 %v121, %v121
    %v143 = vmul.f32 %v141, %v141
    %v144 = vmul.f32 %v142, %v142
    %v145 = vmul.f32 %v122, %v122
    %v146 = vmul.f32 %v123, %v123
    %v147 = vmul.f32 %v145, %v145
    %v148 = vmul.f32 %v146, %v146
    %v149 = vadd.f32 %v147, %v143
    %v150 = vadd.f32 %v148, %v144
    %v151 = vrcp.pop %v149
    %v152 = vrcp.pop %v150
    %v153 = vmul.f32 %v149, %v151
    %v154 = vmul.f32 %v150, %v152
    %v155 = vsub.f32 2.0, %v153
    %v156 = vsub.f32 2.0, %v154
    %v157 = vmul.f32 %v151, %v155
    %v158 = vmul.f32 %v152, %v156
    %v159 = vmul.f32 %v147, %v157
    %v160 = vmul.f32 %v148, %v158
    %v161 = vmul.f32 %v110, %v159
    %v162 = vmul.f32 %v111, %v160
    %v163 = vsub.f32 %v161, %v116
    %v164 = vsub.f32 %v162, %v117
    %v165 = vmul.f32 %v163, %v163
    %v166 = vmul.f32 %v164, %v164
    %vm167 = vcmp.gt.f32.partialorder %v108, 0.5
    %vm168 = vcmp.gt.f32.partialorder %v109, 0.5
    %v169 = vsel %vm167, 1, 0
    %v170 = vsel %vm168, 1, 0
    %v171 = vcvt.s32.f32 %v169
    %v172 = vcvt.s32.f32 %v170
    %v173 = vand.u32 2147483647, %v116
    %v174 = vand.u32 2147483647, %v117
    %v175 = vmul.f32 %v173, %v173
    %v176 = vmul.f32 %v174, %v174
    %v177 = vmul.f32 %v165, %v175
    %v178 = vmul.f32 %v166, %v176
    %v179 = vmul.f32 %v171, %v114
    %v180 = vmul.f32 %v172, %v115
    %v181 = vld [vmem:[#allocation10] sm:$0xff]
    %v182 = vadd.f32 %v139, %v140
    %v183 = vadd.f32 %v181, %v182
    %184 = vst [vmem:[#allocation10] sm:$0xff] %v183
    %s185 = scalar_lea.vmem [#allocation10], 8
    %v186 = vld [vmem:[%s185] sm:$0xff]
    %v187 = vadd.f32 %v165, %v166
    %v188 = vadd.f32 %v186, %v187
    %189 = vst [vmem:[%s185] sm:$0xff] %v188
    %s190 = scalar_lea.vmem [#allocation10], 16
    %v191 = vld [vmem:[%s190] sm:$0xff]
    %v192 = vadd.f32 %v177, %v178
    %v193 = vadd.f32 %v191, %v192
    %194 = vst [vmem:[%s190] sm:$0xff] %v193
    %s195 = scalar_lea.vmem [#allocation10], 24
    %v196 = vld [vmem:[%s195] sm:$0xff]
    %v197 = vadd.f32 %v175, %v176
    %v198 = vadd.f32 %v196, %v197
    %199 = vst [vmem:[%s195] sm:$0xff] %v198
    %s200 = scalar_lea.vmem [#allocation10], 32
    %v201 = vld [vmem:[%s200] sm:$0xff]
    %v202 = vadd.f32 %v171, %v172
    %v203 = vadd.f32 %v201, %v202
    %204 = vst [vmem:[%s200] sm:$0xff] %v203
    %s205 = scalar_lea.vmem [#allocation10], 40
    %v206 = vld [vmem:[%s205] sm:$0xff]
    %v207 = vadd.f32 %v114, %v115
    %v208 = vadd.f32 %v206, %v207
    %209 = vst [vmem:[%s205] sm:$0xff] %v208
    %s210 = scalar_lea.vmem [#allocation10], 48
    %v211 = vld [vmem:[%s210] sm:$0xff]
    %v212 = vadd.f32 %v179, %v180
    %v213 = vadd.f32 %v211, %v212
    %214 = vst [vmem:[%s210] sm:$0xff] %v213
    // Predicated region
    $region38: #{tpu_custom_call.1} parent=1 // pred_check
      _
    $region39: #{tpu_custom_call.1} parent=1 // pred_check_branch
      %216 = sbr.rel (0) target = $region41
    $region40: #{tpu_custom_call.1} parent=1 // pred_region
      %s218 = ssub.s32 896, 896
      %219 = vsyncadd [#allocation4], %s218
      %s220 = sshll.u32 [#allocation10], 4
      %s221 = int_to_ptr.vmem [resolvable:$true] %s220
      %226 = dma.vmem_to_hbm [thread:$0]  %s221, 896, %s4, [#allocation4], 128, 128, 8
    $region41: #{tpu_custom_call.1} parent=1 // pred_fallthru
      _
    // Predicated region
    $region42: #{tpu_custom_call.1} parent=1 // pred_check
      _
    $region43: #{tpu_custom_call.1} parent=1 // pred_check_branch
      %228 = sbr.rel (0) target = $region45
    $region44: #{tpu_custom_call.1} parent=1 // pred_region
      %229 = dma.done [#allocation4], 896
    $region45: #{tpu_custom_call.1} parent=1 // pred_fallthru
      _
    %230 = vsyncpa [#allocation3], 1
    %231 = vsyncpa [#allocation6], 1
    %232 = vsyncpa [#allocation9], 1
    %233 = vsyncpa [#allocation4], 1

</llo_original>
